<compile_context>
chip_gen: v7x
topology: tpu7x:2x2x1
jax: 0.10.0
libtpu: 0.0.40
codegen_flags: <defaults>
</compile_context>

<pallas_src>
import jax
import jax.numpy as jnp
from jax.experimental import pallas as pl
from jax.experimental.pallas import tpu as pltpu


# --------------------------------------------------------------------------
# Kernels
# --------------------------------------------------------------------------
def _attention_pool(x3, w):
    """Shared pooling math: (TB, N, F), (F, H) -> lane-dense (TB, H*F)."""
    TB, N, F = x3.shape
    H = w.shape[1]

    x = x3.reshape(TB * N, F)                                  # one big MXU operand
    scores = jnp.dot(x, w, preferred_element_type=jnp.float32)  # (TB*N, H)
    scores3 = scores.reshape(TB, N, H)

    # softmax over the news axis (N)
    m = jnp.max(scores3, axis=1, keepdims=True)                # (TB, 1, H)
    e = jnp.exp(scores3 - m)                                   # (TB, N, H)
    denom = jnp.sum(e, axis=1, keepdims=True)                  # (TB, 1, H)
    weights = e * pl.reciprocal(denom, approx=True)            # (TB, N, H)

    # pooled[t, h, f] = sum_n weights[t, n, h] * x[t, n, f]     -> (TB, H, F)
    pooled = jax.lax.dot_general(
        weights, x3,
        dimension_numbers=(((1,), (1,)), ((0,), (0,))),
        preferred_element_type=jnp.float32,
    )
    return pooled.reshape(TB, H * F)


def _omap_train_kernel(sa_ref, clicked_ref, w_ref, user_ref, reg_ref):
    # sa_ref / clicked_ref : (TB, N, F) batch tile
    # w_ref                : (F, H) full weight matrix (VMEM-resident)
    # user_ref             : (TB, H*F) lane-dense output tile
    # reg_ref              : (TB, 1) per-example regularizer sums
    TB, N, F = sa_ref.shape
    w = w_ref[...]

    user_ref[...] = _attention_pool(sa_ref[...], w).astype(user_ref.dtype)

    # ---- orthogonality regularizer: || c - (c @ W) @ W^T ||_2 over F, sum over N
    c3 = clicked_ref[...]                                      # (TB, N, F)
    c = c3.reshape(TB * N, F)
    cw = jnp.dot(c, w, preferred_element_type=jnp.float32)     # (TB*N, H)
    proj = jax.lax.dot_general(                                # (cW) W^T -> (TB*N, F)
        cw, w,
        dimension_numbers=(((1,), (1,)), ((), ())),
        preferred_element_type=jnp.float32,
    )
    diff = c3 - proj.reshape(TB, N, F)                         # (TB, N, F)
    norms = jnp.sqrt(jnp.sum(diff * diff, axis=2))             # (TB, N)  lane-reduce
    reg_ref[...] = jnp.sum(norms, axis=1, keepdims=True)       # (TB, 1)


def _omap_infer_kernel(sa_ref, w_ref, user_ref):
    # Inference path: no clicked_news_vector read, no regularizer output.
    user_ref[...] = _attention_pool(sa_ref[...], w_ref[...]).astype(user_ref.dtype)


# --------------------------------------------------------------------------
# Tiling heuristic
# --------------------------------------------------------------------------
def _choose_tb(B, N, F, H, training):
    """Pick a batch-tile size: big enough to feed the MXU / amortize grid
    overhead, small enough for a conservative cross-chip VMEM budget."""
    # Aim for ~1024 flattened (TB*N) rows per score matmul.
    target = max(1, 1024 // max(N, 1))
    # Conservative per-example working-set estimate (bytes):
    #   pipelined inputs  : (2 if training else 1) arrays x 2 buffers x N*F*4
    #   intermediates     : ~5 x N*F*4  (scores/exp/weights/proj/diff)
    #   output buffers    : 2 x H*F*4 (+ tiny reg column)
    in_arrays = 2 if training else 1
    per_ex = (in_arrays * 2 + 5) * N * F * 4 + 2 * H * F * 4 + 2 * N * H * 4
    budget = 12 * 1024 * 1024          # safe under the 16 MiB v5e scoped default
    vmem_cap = max(1, budget // max(per_ex, 1))
    tb = min(B, target, vmem_cap)
    if tb < B:
        # Multiple grid tiles: keep TB a multiple of 8 so the (TB, H*F) / (TB, 1)
        # output blocks tile cleanly on sublanes.
        tb = max(8, (tb // 8) * 8)
    return tb


# --------------------------------------------------------------------------
# Wrapper
# --------------------------------------------------------------------------
def omap_forward(self_attended, clicked, W, *, training=True, block_batch=None):
    """Pallas implementation of OMAP.forward.

    Args:
      self_attended: (B, N, F) float32
      clicked:       (B, N, F) float32 (only read when training=True)
      W:             (F, H)    float32
    Returns:
      (user_archive_vector (B, H, F), regularizer_loss scalar or None)
    """
    B, N, F = self_attended.shape
    Fw, H = W.shape
    assert Fw == F

    tb = _choose_tb(B, N, F, H, training) if block_batch is None else block_batch
    num_tiles = pl.cdiv(B, tb)

    sa_spec = pl.BlockSpec((tb, N, F), lambda b: (b, 0, 0))
    w_spec = pl.BlockSpec((F, H), lambda b: (0, 0))            # resident across tiles
    user_spec = pl.BlockSpec((tb, H * F), lambda b: (b, 0))
    params = pltpu.CompilerParams(dimension_semantics=("parallel",))

    if training:
        user_flat, reg_per_ex = pl.pallas_call(
            _omap_train_kernel,
            out_shape=(
                jax.ShapeDtypeStruct((B, H * F), jnp.float32),
                jax.ShapeDtypeStruct((B, 1), jnp.float32),
            ),
            grid_spec=pltpu.PrefetchScalarGridSpec(
                num_scalar_prefetch=0,
                grid=(num_tiles,),
                in_specs=[sa_spec,
                          pl.BlockSpec((tb, N, F), lambda b: (b, 0, 0)),
                          w_spec],
                out_specs=[user_spec,
                           pl.BlockSpec((tb, 1), lambda b: (b, 0))],
            ),
            compiler_params=params,
        )(self_attended, clicked, W)
        user = user_flat.reshape(B, H, F)
        reg_loss = jnp.mean(reg_per_ex[:, 0])
        return user, reg_loss

    user_flat = pl.pallas_call(
        _omap_infer_kernel,
        out_shape=jax.ShapeDtypeStruct((B, H * F), jnp.float32),
        grid_spec=pltpu.PrefetchScalarGridSpec(
            num_scalar_prefetch=0,
            grid=(num_tiles,),
            in_specs=[sa_spec, w_spec],
            out_specs=user_spec,
        ),
        compiler_params=params,
    )(self_attended, W)
    return user_flat.reshape(B, H, F), None


# --------------------------------------------------------------------------
# Self-test
# --------------------------------------------------------------------------
if __name__ == "__main__":
    # Small, deterministic test shapes consistent with the module.
    B = 2          # batch_size
    N = 8          # num_clicked_news_a_user
    F = 32         # num_filters
    H = 4          # num_pooling_heads

    key = jax.random.PRNGKey(0)
    k_sa, k_c, k_w = jax.random.split(key, 3)

    self_attended = jax.random.normal(k_sa, (B, N, F), dtype=jnp.float32)
    clicked = jax.random.normal(k_c, (B, N, F), dtype=jnp.float32)
    # W ~ Uniform(-0.1, 0.1), matching nn.Parameter(torch.empty(F, H).uniform_(-0.1, 0.1))
    W = jax.random.uniform(k_w, (F, H), minval=-0.1, maxval=0.1, dtype=jnp.float32)

    # Training path (user vector + regularizer).
    user_archive, reg_loss = omap_forward(self_attended, clicked, W, training=True)
    user_archive = jax.block_until_ready(user_archive)
    reg_loss = jax.block_until_ready(reg_loss)

    # Inference path (no clicked read, no regularizer).
    user_eval, reg_eval = omap_forward(self_attended, clicked, W, training=False)
    user_eval = jax.block_until_ready(user_eval)

    # Pure-JAX reference check.
    scores = jnp.einsum("bnf,fh->bnh", self_attended, W)
    ref_weights = jax.nn.softmax(jnp.swapaxes(scores, 1, 2), axis=2)      # (B, H, N)
    ref_user = jnp.einsum("bhn,bnf->bhf", ref_weights, self_attended)     # (B, H, F)
    wwt = W @ W.T
    ref_norm = jnp.linalg.norm(clicked - jnp.einsum("bnf,fg->bng", clicked, wwt), axis=2)
    ref_reg = jnp.mean(jnp.sum(ref_norm, axis=1))

    assert user_archive.shape == (B, H, F)
    # approx=True reciprocal in the softmax introduces a tiny relative error,
    # so the user-vector tolerance is slightly loosened.
    assert jnp.allclose(user_archive, ref_user, atol=5e-3, rtol=1e-3)
    assert jnp.allclose(user_eval, ref_user, atol=5e-3, rtol=1e-3)
    assert jnp.allclose(reg_loss, ref_reg, atol=1e-3, rtol=1e-3)
    assert reg_eval is None

    print("KERNEL_OK")
</pallas_src>

<mosaic_0001>
module attributes {stable_mosaic.version = 11 : i64} {
  func.func @_omap_train_kernel(%arg0: i32, %arg1: memref<2x8x32xf32, #tpu.memory_space<vmem>>, %arg2: memref<2x8x32xf32, #tpu.memory_space<vmem>>, %arg3: memref<32x4xf32, #tpu.memory_space<vmem>>, %arg4: memref<2x128xf32, #tpu.memory_space<vmem>>, %arg5: memref<2x1xf32, #tpu.memory_space<vmem>>) attributes {dimension_semantics = [#tpu.dimension_semantics<parallel>], iteration_bounds = array<i64: 1>, scalar_prefetch = 0 : i64, scratch_operands = 0 : i64, tpu.core_type = #tpu.core_type<tc>, window_params = [{transform_indices = @transform_0, window_bounds = array<i64: 2, 8, 32>}, {transform_indices = @transform_1, window_bounds = array<i64: 2, 8, 32>}, {pipeline_mode = #tpu.pipeline_mode<synchronous>, transform_indices = @transform_2, window_bounds = array<i64: 32, 4>}, {transform_indices = @transform_3, window_bounds = array<i64: 2, 128>}, {transform_indices = @transform_4, window_bounds = array<i64: 2, 1>}]} {
    %c0 = arith.constant 0 : index
    %c0_0 = arith.constant 0 : index
    %0 = vector.load %arg3[%c0, %c0_0] : memref<32x4xf32, #tpu.memory_space<vmem>>, vector<32x4xf32>
    %c0_1 = arith.constant 0 : index
    %c0_2 = arith.constant 0 : index
    %c0_3 = arith.constant 0 : index
    %1 = vector.load %arg1[%c0_1, %c0_2, %c0_3] : memref<2x8x32xf32, #tpu.memory_space<vmem>>, vector<2x8x32xf32>
    %2 = vector.shape_cast %1 : vector<2x8x32xf32> to vector<16x32xf32>
    %cst = arith.constant dense<0.000000e+00> : vector<16x4xf32>
    %3 = tpu.matmul %2, %0, %cst {dimension_numbers = #tpu.dot_dimension_numbers<[1], [0], [0], [1], [0, 0, 1, 1], [], []>} : vector<16x32xf32>, vector<32x4xf32>, vector<16x4xf32> -> vector<16x4xf32>
    %4 = vector.shape_cast %3 : vector<16x4xf32> to vector<2x8x4xf32>
    %cst_4 = arith.constant dense<0xFF800000> : vector<2x4xf32>
    %5 = vector.multi_reduction <maximumf>, %4, %cst_4 [1] : vector<2x8x4xf32> to vector<2x4xf32>
    %6 = vector.shape_cast %5 : vector<2x4xf32> to vector<2x1x4xf32>
    %7 = vector.broadcast %6 : vector<2x1x4xf32> to vector<2x8x4xf32>
    %8 = arith.subf %4, %7 : vector<2x8x4xf32>
    %9 = math.exp %8 : vector<2x8x4xf32>
    %cst_5 = arith.constant dense<0.000000e+00> : vector<2x4xf32>
    %10 = vector.multi_reduction <add>, %9, %cst_5 [1] : vector<2x8x4xf32> to vector<2x4xf32>
    %11 = vector.shape_cast %10 : vector<2x4xf32> to vector<2x1x4xf32>
    %12 = tpu.reciprocal %11 {approx = true} : vector<2x1x4xf32> -> vector<2x1x4xf32>
    %13 = vector.broadcast %12 : vector<2x1x4xf32> to vector<2x8x4xf32>
    %14 = arith.mulf %9, %13 : vector<2x8x4xf32>
    %cst_6 = arith.constant dense<0.000000e+00> : vector<2x4x32xf32>
    %15 = tpu.matmul %14, %1, %cst_6 {dimension_numbers = #tpu.dot_dimension_numbers<[1], [1], [2], [2], [0, 0, 0, 2, 1, 2], [0], [0]>} : vector<2x8x4xf32>, vector<2x8x32xf32>, vector<2x4x32xf32> -> vector<2x4x32xf32>
    %16 = vector.shape_cast %15 : vector<2x4x32xf32> to vector<2x128xf32>
    %c0_7 = arith.constant 0 : index
    %c0_8 = arith.constant 0 : index
    %17 = vector.load %arg4[%c0_7, %c0_8] : memref<2x128xf32, #tpu.memory_space<vmem>>, vector<2x128xf32>
    tpu.vector_store %arg4[%c0_7, %c0_8], %16 {strides = array<i32>} : memref<2x128xf32, #tpu.memory_space<vmem>>, vector<2x128xf32>,
    %c0_9 = arith.constant 0 : index
    %c0_10 = arith.constant 0 : index
    %c0_11 = arith.constant 0 : index
    %18 = vector.load %arg2[%c0_9, %c0_10, %c0_11] : memref<2x8x32xf32, #tpu.memory_space<vmem>>, vector<2x8x32xf32>
    %19 = vector.shape_cast %18 : vector<2x8x32xf32> to vector<16x32xf32>
    %cst_12 = arith.constant dense<0.000000e+00> : vector<16x4xf32>
    %20 = tpu.matmul %19, %0, %cst_12 {dimension_numbers = #tpu.dot_dimension_numbers<[1], [0], [0], [1], [0, 0, 1, 1], [], []>} : vector<16x32xf32>, vector<32x4xf32>, vector<16x4xf32> -> vector<16x4xf32>
    %cst_13 = arith.constant dense<0.000000e+00> : vector<16x32xf32>
    %21 = tpu.matmul %20, %0, %cst_13 {dimension_numbers = #tpu.dot_dimension_numbers<[1], [1], [0], [0], [0, 0, 1, 0], [], []>} : vector<16x4xf32>, vector<32x4xf32>, vector<16x32xf32> -> vector<16x32xf32>
    %22 = vector.shape_cast %21 : vector<16x32xf32> to vector<2x8x32xf32>
    %23 = arith.subf %18, %22 : vector<2x8x32xf32>
    %24 = arith.mulf %23, %23 : vector<2x8x32xf32>
    %cst_14 = arith.constant dense<0.000000e+00> : vector<2x8xf32>
    %25 = vector.multi_reduction <add>, %24, %cst_14 [2] : vector<2x8x32xf32> to vector<2x8xf32>
    %26 = math.sqrt %25 : vector<2x8xf32>
    %cst_15 = arith.constant dense<0.000000e+00> : vector<2xf32>
    %27 = vector.multi_reduction <add>, %26, %cst_15 [1] : vector<2x8xf32> to vector<2xf32>
    %28 = vector.shape_cast %27 : vector<2xf32> to vector<2x1xf32>
    %c0_16 = arith.constant 0 : index
    %c0_17 = arith.constant 0 : index
    %29 = vector.load %arg5[%c0_16, %c0_17] : memref<2x1xf32, #tpu.memory_space<vmem>>, vector<2x1xf32>
    tpu.vector_store %arg5[%c0_16, %c0_17], %28 {strides = array<i32>} : memref<2x1xf32, #tpu.memory_space<vmem>>, vector<2x1xf32>,
    return
  }
  func.func @transform_0(%arg0: i32) -> (i32, i32, i32) {
    %c0_i32 = arith.constant 0 : i32
    %c0_i32_0 = arith.constant 0 : i32
    %c0_i32_1 = arith.constant 0 : i32
    return %arg0, %c0_i32, %c0_i32_0 : i32, i32, i32
  }
  func.func @transform_1(%arg0: i32) -> (i32, i32, i32) {
    %c0_i32 = arith.constant 0 : i32
    %c0_i32_0 = arith.constant 0 : i32
    %c0_i32_1 = arith.constant 0 : i32
    return %arg0, %c0_i32, %c0_i32_0 : i32, i32, i32
  }
  func.func @transform_2(%arg0: i32) -> (i32, i32) {
    %c0_i32 = arith.constant 0 : i32
    %c0_i32_0 = arith.constant 0 : i32
    %c0_i32_1 = arith.constant 0 : i32
    return %c0_i32, %c0_i32_0 : i32, i32
  }
  func.func @transform_3(%arg0: i32) -> (i32, i32) {
    %c0_i32 = arith.constant 0 : i32
    %c0_i32_0 = arith.constant 0 : i32
    return %arg0, %c0_i32 : i32, i32
  }
  func.func @transform_4(%arg0: i32) -> (i32, i32) {
    %c0_i32 = arith.constant 0 : i32
    %c0_i32_0 = arith.constant 0 : i32
    return %arg0, %c0_i32 : i32, i32
  }
}

</mosaic_0001>

<llo_original>
// kernel: tpu_custom_call.1
$region0: #{tpu_custom_call.1}
  #allocation0 [shape = 'u32[]', space=smem, size = 0x4, offset = 0x4, fixed_abs, tag = 'smem constant byte address 0x4 - core index']
  #allocation1 [shape = 'u32[144,128]{1,0:T(1,128)}', space=vmem, size = 0x12000, scoped, tag = 'internal scratch']
  %s0 = inlined_call_operand.vmem [shape: f32[2,8,32], index: 0, kind: input, shape index: {}]
  %s1 = inlined_call_operand.vmem [shape: f32[2,8,32], index: 1, kind: input, shape index: {}]
  %s2 = inlined_call_operand.vmem [shape: f32[32,4], index: 2, kind: input, shape index: {}]
  %s3 = inlined_call_operand.hbm [shape: f32[2,128], index: 3, kind: output, shape index: {0}]
  %s4 = inlined_call_operand.vmem [shape: f32[2,1], index: 4, kind: output, shape index: {1}]
  %5 = xla_tuple %s3, %s4
  %s6 = sld [smem:[#allocation0]]
  $region30: #{tpu_custom_call.1} parent=0
    _
  %s8 = ssub.s32 1, %s6
  %s9 = scalar_select 0, %s8, %s6
  $region1: #{tpu_custom_call.1} parent=0
    #allocation2 [shape = 'u8[1024]{0}', space=vmem, size = 0x400, scoped, tag = 'output window, operand 0, single buffered']
    #allocation3 [shape = 's32[1]{0}', space=sflag, size = 0x4, scoped, tag = 'scoped memory for tpu_custom_call.1']
    %10 = vsyncpa [#allocation3], 0
    // Predicated region
    $region2: #{tpu_custom_call.1} parent=1 // pred_check
      _
    $region3: #{tpu_custom_call.1} parent=1 // pred_check_branch
      %12 = sbr.rel (0) target = $region5
    $region4: #{tpu_custom_call.1} parent=1 // pred_region
      _
    $region5: #{tpu_custom_call.1} parent=1 // pred_fallthru
      _
    // Predicated region
    $region6: #{tpu_custom_call.1} parent=1 // pred_check
      _
    $region7: #{tpu_custom_call.1} parent=1 // pred_check_branch
      %14 = sbr.rel (0) target = $region9
    $region8: #{tpu_custom_call.1} parent=1 // pred_region
      _
    $region9: #{tpu_custom_call.1} parent=1 // pred_fallthru
      _
    // Predicated region
    $region10: #{tpu_custom_call.1} parent=1 // pred_check
      _
    $region11: #{tpu_custom_call.1} parent=1 // pred_check_branch
      %16 = sbr.rel (0) target = $region13
    $region12: #{tpu_custom_call.1} parent=1 // pred_region
      _
    $region13: #{tpu_custom_call.1} parent=1 // pred_fallthru
      _
    %v17 = vld [vmem:[%s2] sm:$0xff]
    %v18 = vld [vmem:[%s2 + $0x8] sm:$0xff]
    %v19 = vld [vmem:[%s2 + $0x10] sm:$0xff]
    %v20 = vld [vmem:[%s2 + $0x18] sm:$0xff]
    %v21 = vld [vmem:[%s0] sm:$0xff]
    %v22 = vld [vmem:[%s0 + $0x8] sm:$0xff]
    %vm23 = vcmask 261120
    %v25 = vsel %vm23, %v21, 0
    %v28 = vsel %vm23, %v22, 0
    %30 = vmatprep.subr.mxu0 0.0
    %31 = vmatpush1.msra.mxu0 %v17
    %32 = vmatprep.subr.mxu0 0.0
    %33 = vmatpush1.msra.mxu0 %v18
    %34 = vmatprep.subr.mxu0 0.0
    %35 = vmatpush1.msra.mxu0 %v19
    %36 = vmatprep.subr.mxu0 0.0
    %37 = vmatpush1.msra.mxu0 %v20
    %38 = vmatprep.subr.mxu0 0.0
    %39 = vmatpush1.msra.mxu0 0.0
    %40 = vmatprep.subr.mxu0 0.0
    %41 = vmatpush1.msra.mxu0 0.0
    %42 = vmatprep.subr.mxu0 0.0
    %43 = vmatpush1.msra.mxu0 0.0
    %44 = vmatprep.subr.mxu0 0.0
    %45 = vmatpush1.msra.mxu0 0.0
    %46 = vmatprep.subr.mxu0 0.0
    %47 = vmatpush1.msra.mxu0 0.0
    %48 = vmatprep.subr.mxu0 0.0
    %49 = vmatpush1.msra.mxu0 0.0
    %50 = vmatprep.subr.mxu0 0.0
    %51 = vmatpush1.msra.mxu0 0.0
    %52 = vmatprep.subr.mxu0 0.0
    %53 = vmatpush1.msra.mxu0 0.0
    %54 = vmatprep.subr.mxu0 0.0
    %55 = vmatpush1.msra.mxu0 0.0
    %56 = vmatprep.subr.mxu0 0.0
    %57 = vmatpush1.msra.mxu0 0.0
    %58 = vmatprep.subr.mxu0 0.0
    %59 = vmatpush1.msra.mxu0 0.0
    %60 = vmatprep.subr.mxu0 0.0
    %61 = vmatpush1.msra.mxu0 0.0
    %62 = vmatprep.subr.mxu0 0.0
    %63 = vmatpush1.msra.mxu0 0.0
    %64 = vmatprep.subr.mxu0 0.0
    %65 = vmatpush1.msra.mxu0 0.0
    %66 = vmatprep.subr.mxu0 0.0
    %67 = vmatpush1.msra.mxu0 0.0
    %68 = vmatprep.subr.mxu0 0.0
    %69 = vmatpush1.msra.mxu0 0.0
    %70 = vmatprep.subr.mxu0 0.0
    %71 = vmatpush1.msra.mxu0 0.0
    %72 = vmatprep.subr.mxu0 0.0
    %73 = vmatpush1.msra.mxu0 0.0
    %74 = vmatprep.subr.mxu0 0.0
    %75 = vmatpush1.msra.mxu0 0.0
    %76 = vmatprep.subr.mxu0 0.0
    %77 = vmatpush1.msra.mxu0 0.0
    %78 = vmatprep.subr.mxu0 0.0
    %79 = vmatpush1.msra.mxu0 0.0
    %80 = vmatprep.subr.mxu0 0.0
    %81 = vmatpush1.msra.mxu0 0.0
    %82 = vmatprep.subr.mxu0 0.0
    %83 = vmatpush1.msra.mxu0 0.0
    %84 = vmatprep.subr.mxu0 0.0
    %85 = vmatpush1.msra.mxu0 0.0
    %86 = vmatprep.subr.mxu0 0.0
    %87 = vmatpush1.msra.mxu0 0.0
    %88 = vmatprep.subr.mxu0 0.0
    %89 = vmatpush1.msra.mxu0 0.0
    %90 = vmatprep.subr.mxu0 0.0
    %91 = vmatpush1.msra.mxu0 0.0
    %92 = vmatprep.subr.mxu0 0.0
    %93 = vmatpush1.msra.mxu0 0.0
    %94 = vmatprep.mubr.f32.mxu0 0.0
    %95 = vmatmul.mubr.f32.gmra.mrb[0].mxu0 %v25
    %v96 = vpop.f32.mrb[0].mxu0
    %v97 = vadd.f32 0.0, %v96
    %v98 = vpop.f32.mrb[0].mxu0
    %99 = vmatprep.mubr.f32.mxu0 0.0
    %100 = vmatmul.mubr.f32.gmra.mrb[0].mxu0 %v28
    %v101 = vpop.f32.mrb[0].mxu0
    %v102 = vadd.f32 0.0, %v101
    %v103 = vpop.f32.mrb[0].mxu0
    %104 = vdwg.mxu0
    %vm105 = vcmask 31744
    %v106 = vsel %vm105, %v97, -inf
    %v107 = vrot.slane %v106, 4
    %v108 = vmax.f32 %v106, %v107
    %v109 = vrot.slane %v108, 2
    %v110 = vmax.f32 %v108, %v109
    %v111 = vrot.slane %v110, 1
    %v112 = vmax.f32 %v110, %v111
    %v113 = vsel %vm105, %v102, -inf
    %v114 = vrot.slane %v113, 4
    %v115 = vmax.f32 %v113, %v114
    %v116 = vrot.slane %v115, 2
    %v117 = vmax.f32 %v115, %v116
    %v118 = vrot.slane %v117, 1
    %v119 = vmax.f32 %v117, %v118
    %v120 = vsub.f32 %v97, %v112
    %v121 = vsub.f32 %v102, %v119
    %v122 = vmul.f32 %v120, 1.442695
    %v123 = vpow.pop %v122
    %v124 = vmul.f32 %v121, 1.442695
    %v125 = vpow.pop %v124
    %v126 = vsel %vm105, %v123, 0.0
    %v127 = vrot.slane %v126, 4
    %v128 = vadd.f32 %v126, %v127
    %v129 = vrot.slane %v128, 2
    %v130 = vadd.f32 %v128, %v129
    %v131 = vrot.slane %v130, 1
    %v132 = vadd.f32 %v130, %v131
    %v133 = vsel %vm105, %v125, 0.0
    %v134 = vrot.slane %v133, 4
    %v135 = vadd.f32 %v133, %v134
    %v136 = vrot.slane %v135, 2
    %v137 = vadd.f32 %v135, %v136
    %v138 = vrot.slane %v137, 1
    %v139 = vadd.f32 %v137, %v138
    %v140 = vrcp.pop %v132
    %v141 = vrcp.pop %v139
    %v142 = vmul.f32 %v123, %v140
    %v143 = vmul.f32 %v125, %v141
    %144 = vxpose.xlu0.b32.start [1/16] %v142, 128
    %145 = vxpose.xlu0.b32.cont [2/16] 0.0, 128
    %146 = vxpose.xlu0.b32.cont [3/16] 0.0, 128
    %147 = vxpose.xlu0.b32.cont [4/16] 0.0, 128
    %148 = vxpose.xlu0.b32.cont [5/16] 0.0, 128
    %149 = vxpose.xlu0.b32.cont [6/16] 0.0, 128
    %150 = vxpose.xlu0.b32.cont [7/16] 0.0, 128
    %151 = vxpose.xlu0.b32.cont [8/16] 0.0, 128
    %152 = vxpose.xlu0.b32.cont [9/16] 0.0, 128
    %153 = vxpose.xlu0.b32.cont [10/16] 0.0, 128
    %154 = vxpose.xlu0.b32.cont [11/16] 0.0, 128
    %155 = vxpose.xlu0.b32.cont [12/16] 0.0, 128
    %156 = vxpose.xlu0.b32.cont [13/16] 0.0, 128
    %157 = vxpose.xlu0.b32.cont [14/16] 0.0, 128
    %158 = vxpose.xlu0.b32.cont [15/16] 0.0, 128
    %159 = vxpose.xlu0.b32.end [16/16] 0.0, 128
    %v160 = vpop.trf.xlu0
    %v161 = vpop.trf.xlu0
    %v162 = vpop.trf.xlu0
    %v163 = vpop.trf.xlu0
    %v164 = vpop.trf.xlu0
    %v165 = vpop.trf.xlu0
    %v166 = vpop.trf.xlu0
    %v167 = vpop.trf.xlu0
    %v168 = vpop.trf.xlu0
    %v169 = vpop.trf.xlu0
    %v170 = vpop.trf.xlu0
    %v171 = vpop.trf.xlu0
    %v172 = vpop.trf.xlu0
    %v173 = vpop.trf.xlu0
    %v174 = vpop.trf.xlu0
    %v175 = vpop.trf.xlu0
    %vm176 = vcmask 64512
    %v178 = vsel %vm176, %v160, 0
    %180 = vmatprep.subr.mxu0 0.0
    %181 = vmatpush1.msra.mxu0 %v21
    %182 = vmatprep.subr.mxu0 0.0
    %183 = vmatpush1.msra.mxu0 0.0
    %184 = vmatprep.subr.mxu0 0.0
    %185 = vmatpush1.msra.mxu0 0.0
    %186 = vmatprep.subr.mxu0 0.0
    %187 = vmatpush1.msra.mxu0 0.0
    %188 = vmatprep.subr.mxu0 0.0
    %189 = vmatpush1.msra.mxu0 0.0
    %190 = vmatprep.subr.mxu0 0.0
    %191 = vmatpush1.msra.mxu0 0.0
    %192 = vmatprep.subr.mxu0 0.0
    %193 = vmatpush1.msra.mxu0 0.0
    %194 = vmatprep.subr.mxu0 0.0
    %195 = vmatpush1.msra.mxu0 0.0
    %196 = vmatprep.subr.mxu0 0.0
    %197 = vmatpush1.msra.mxu0 0.0
    %198 = vmatprep.subr.mxu0 0.0
    %199 = vmatpush1.msra.mxu0 0.0
    %200 = vmatprep.subr.mxu0 0.0
    %201 = vmatpush1.msra.mxu0 0.0
    %202 = vmatprep.subr.mxu0 0.0
    %203 = vmatpush1.msra.mxu0 0.0
    %204 = vmatprep.subr.mxu0 0.0
    %205 = vmatpush1.msra.mxu0 0.0
    %206 = vmatprep.subr.mxu0 0.0
    %207 = vmatpush1.msra.mxu0 0.0
    %208 = vmatprep.subr.mxu0 0.0
    %209 = vmatpush1.msra.mxu0 0.0
    %210 = vmatprep.subr.mxu0 0.0
    %211 = vmatpush1.msra.mxu0 0.0
    %212 = vmatprep.subr.mxu0 0.0
    %213 = vmatpush1.msra.mxu0 0.0
    %214 = vmatprep.subr.mxu0 0.0
    %215 = vmatpush1.msra.mxu0 0.0
    %216 = vmatprep.subr.mxu0 0.0
    %217 = vmatpush1.msra.mxu0 0.0
    %218 = vmatprep.subr.mxu0 0.0
    %219 = vmatpush1.msra.mxu0 0.0
    %220 = vmatprep.subr.mxu0 0.0
    %221 = vmatpush1.msra.mxu0 0.0
    %222 = vmatprep.subr.mxu0 0.0
    %223 = vmatpush1.msra.mxu0 0.0
    %224 = vmatprep.subr.mxu0 0.0
    %225 = vmatpush1.msra.mxu0 0.0
    %226 = vmatprep.subr.mxu0 0.0
    %227 = vmatpush1.msra.mxu0 0.0
    %228 = vmatprep.subr.mxu0 0.0
    %229 = vmatpush1.msra.mxu0 0.0
    %230 = vmatprep.subr.mxu0 0.0
    %231 = vmatpush1.msra.mxu0 0.0
    %232 = vmatprep.subr.mxu0 0.0
    %233 = vmatpush1.msra.mxu0 0.0
    %234 = vmatprep.subr.mxu0 0.0
    %235 = vmatpush1.msra.mxu0 0.0
    %236 = vmatprep.subr.mxu0 0.0
    %237 = vmatpush1.msra.mxu0 0.0
    %238 = vmatprep.subr.mxu0 0.0
    %239 = vmatpush1.msra.mxu0 0.0
    %240 = vmatprep.subr.mxu0 0.0
    %241 = vmatpush1.msra.mxu0 0.0
    %242 = vmatprep.subr.mxu0 0.0
    %243 = vmatpush1.msra.mxu0 0.0
    %244 = vmatprep.mubr.f32.mxu0 0.0
    %245 = vmatmul.mubr.f32.gmra.mrb[0].mxu0 %v178
    %v246 = vpop.f32.mrb[0].mxu0
    %v247 = vadd.f32 0.0, %v246
    %v248 = vpop.f32.mrb[0].mxu0
    %249 = vdwg.mxu0
    %250 = vxpose.xlu0.b32.start [1/16] %v143, 128
    %251 = vxpose.xlu0.b32.cont [2/16] 0.0, 128
    %252 = vxpose.xlu0.b32.cont [3/16] 0.0, 128
    %253 = vxpose.xlu0.b32.cont [4/16] 0.0, 128
    %254 = vxpose.xlu0.b32.cont [5/16] 0.0, 128
    %255 = vxpose.xlu0.b32.cont [6/16] 0.0, 128
    %256 = vxpose.xlu0.b32.cont [7/16] 0.0, 128
    %257 = vxpose.xlu0.b32.cont [8/16] 0.0, 128
    %258 = vxpose.xlu0.b32.cont [9/16] 0.0, 128
    %259 = vxpose.xlu0.b32.cont [10/16] 0.0, 128
    %260 = vxpose.xlu0.b32.cont [11/16] 0.0, 128
    %261 = vxpose.xlu0.b32.cont [12/16] 0.0, 128
    %262 = vxpose.xlu0.b32.cont [13/16] 0.0, 128
    %263 = vxpose.xlu0.b32.cont [14/16] 0.0, 128
    %264 = vxpose.xlu0.b32.cont [15/16] 0.0, 128
    %265 = vxpose.xlu0.b32.end [16/16] 0.0, 128
    %v266 = vpop.trf.xlu0
    %v267 = vpop.trf.xlu0
    %v268 = vpop.trf.xlu0
    %v269 = vpop.trf.xlu0
    %v270 = vpop.trf.xlu0
    %v271 = vpop.trf.xlu0
    %v272 = vpop.trf.xlu0
    %v273 = vpop.trf.xlu0
    %v274 = vpop.trf.xlu0
    %v275 = vpop.trf.xlu0
    %v276 = vpop.trf.xlu0
    %v277 = vpop.trf.xlu0
    %v278 = vpop.trf.xlu0
    %v279 = vpop.trf.xlu0
    %v280 = vpop.trf.xlu0
    %v281 = vpop.trf.xlu0
    %v283 = vsel %vm176, %v266, 0
    %285 = vmatprep.subr.mxu0 0.0
    %286 = vmatpush1.msra.mxu0 %v22
    %287 = vmatprep.subr.mxu0 0.0
    %288 = vmatpush1.msra.mxu0 0.0
    %289 = vmatprep.subr.mxu0 0.0
    %290 = vmatpush1.msra.mxu0 0.0
    %291 = vmatprep.subr.mxu0 0.0
    %292 = vmatpush1.msra.mxu0 0.0
    %293 = vmatprep.subr.mxu0 0.0
    %294 = vmatpush1.msra.mxu0 0.0
    %295 = vmatprep.subr.mxu0 0.0
    %296 = vmatpush1.msra.mxu0 0.0
    %297 = vmatprep.subr.mxu0 0.0
    %298 = vmatpush1.msra.mxu0 0.0
    %299 = vmatprep.subr.mxu0 0.0
    %300 = vmatpush1.msra.mxu0 0.0
    %301 = vmatprep.subr.mxu0 0.0
    %302 = vmatpush1.msra.mxu0 0.0
    %303 = vmatprep.subr.mxu0 0.0
    %304 = vmatpush1.msra.mxu0 0.0
    %305 = vmatprep.subr.mxu0 0.0
    %306 = vmatpush1.msra.mxu0 0.0
    %307 = vmatprep.subr.mxu0 0.0
    %308 = vmatpush1.msra.mxu0 0.0
    %309 = vmatprep.subr.mxu0 0.0
    %310 = vmatpush1.msra.mxu0 0.0
    %311 = vmatprep.subr.mxu0 0.0
    %312 = vmatpush1.msra.mxu0 0.0
    %313 = vmatprep.subr.mxu0 0.0
    %314 = vmatpush1.msra.mxu0 0.0
    %315 = vmatprep.subr.mxu0 0.0
    %316 = vmatpush1.msra.mxu0 0.0
    %317 = vmatprep.subr.mxu0 0.0
    %318 = vmatpush1.msra.mxu0 0.0
    %319 = vmatprep.subr.mxu0 0.0
    %320 = vmatpush1.msra.mxu0 0.0
    %321 = vmatprep.subr.mxu0 0.0
    %322 = vmatpush1.msra.mxu0 0.0
    %323 = vmatprep.subr.mxu0 0.0
    %324 = vmatpush1.msra.mxu0 0.0
    %325 = vmatprep.subr.mxu0 0.0
    %326 = vmatpush1.msra.mxu0 0.0
    %327 = vmatprep.subr.mxu0 0.0
    %328 = vmatpush1.msra.mxu0 0.0
    %329 = vmatprep.subr.mxu0 0.0
    %330 = vmatpush1.msra.mxu0 0.0
    %331 = vmatprep.subr.mxu0 0.0
    %332 = vmatpush1.msra.mxu0 0.0
    %333 = vmatprep.subr.mxu0 0.0
    %334 = vmatpush1.msra.mxu0 0.0
    %335 = vmatprep.subr.mxu0 0.0
    %336 = vmatpush1.msra.mxu0 0.0
    %337 = vmatprep.subr.mxu0 0.0
    %338 = vmatpush1.msra.mxu0 0.0
    %339 = vmatprep.subr.mxu0 0.0
    %340 = vmatpush1.msra.mxu0 0.0
    %341 = vmatprep.subr.mxu0 0.0
    %342 = vmatpush1.msra.mxu0 0.0
    %343 = vmatprep.subr.mxu0 0.0
    %344 = vmatpush1.msra.mxu0 0.0
    %345 = vmatprep.subr.mxu0 0.0
    %346 = vmatpush1.msra.mxu0 0.0
    %347 = vmatprep.subr.mxu0 0.0
    %348 = vmatpush1.msra.mxu0 0.0
    %349 = vmatprep.mubr.f32.mxu0 0.0
    %350 = vmatmul.mubr.f32.gmra.mrb[0].mxu0 %v283
    %v351 = vpop.f32.mrb[0].mxu0
    %v352 = vadd.f32 0.0, %v351
    %v353 = vpop.f32.mrb[0].mxu0
    %354 = vdwg.mxu0
    %v356 = vunpack.c.l.s4 1983009808
    %v357 = vunpack.c.0.s8 %v356
    %v358 = vlaneseq
    %v359 = vshrl.u32 %v358, 7
    %v360 = vsub.s32 %v357, %v359
    %v361 = vrot.slane %v247, %v360
    %v363 = vunpack.c.l.s4 1983009808
    %v364 = vunpack.c.0.s8 %v363
    %v365 = vlaneseq
    %v366 = vshrl.u32 %v365, 7
    %v367 = vsub.s32 %v364, %v366
    %v368 = vrot.slane %v352, %v367
    %v369 = vcombine.low %v361, %v368
    %v370 = vcombine.high %v361, %v368
    %v372 = vunpack.c.l.s4 1934713408
    %v373 = vunpack.c.0.s8 %v372
    %v374 = vlaneseq
    %v375 = vshrl.u32 %v374, 7
    %v376 = vsub.s32 %v373, %v375
    %v377 = vrot.slane %v369, %v376
    %v379 = vunpack.c.l.s4 1934713408
    %v380 = vunpack.c.0.s8 %v379
    %v381 = vlaneseq
    %v382 = vshrl.u32 %v381, 7
    %v383 = vsub.s32 %v380, %v382
    %v384 = vrot.slane %v370, %v383
    %v385 = vcombine.high %v377, 0.0
    %v386 = vcombine.high %v384, 0.0
    %388 = vrot.lane.b32.xlu0 %v385, 32
    %v389 = vpop.permute.xlu0 %388
    %392 = vrot.lane.b32.xlu0 %v384, 64
    %v393 = vpop.permute.xlu0 %392
    %396 = vrot.lane.b32.xlu0 %v386, 96
    %v397 = vpop.permute.xlu0 %396
    %v399 = vsel %vm23, %v377, %v389
    %vm400 = vcmask 523264
    %v401 = vsel %vm400, %v399, %v393
    %vm402 = vcmask 785408
    %v403 = vsel %vm402, %v401, %v397
    %404 = vst [vmem:[#allocation2] sm:$0x3] %v403
    %v405 = vld [vmem:[%s1] sm:$0xff]
    %v406 = vld [vmem:[%s1 + $0x8] sm:$0xff]
    %v408 = vsel %vm23, %v405, 0
    %v411 = vsel %vm23, %v406, 0
    %413 = vmatprep.subr.mxu0 0.0
    %414 = vmatpush1.msra.mxu0 %v17
    %415 = vmatprep.subr.mxu0 0.0
    %416 = vmatpush1.msra.mxu0 %v18
    %417 = vmatprep.subr.mxu0 0.0
    %418 = vmatpush1.msra.mxu0 %v19
    %419 = vmatprep.subr.mxu0 0.0
    %420 = vmatpush1.msra.mxu0 %v20
    %421 = vmatprep.subr.mxu0 0.0
    %422 = vmatpush1.msra.mxu0 0.0
    %423 = vmatprep.subr.mxu0 0.0
    %424 = vmatpush1.msra.mxu0 0.0
    %425 = vmatprep.subr.mxu0 0.0
    %426 = vmatpush1.msra.mxu0 0.0
    %427 = vmatprep.subr.mxu0 0.0
    %428 = vmatpush1.msra.mxu0 0.0
    %429 = vmatprep.subr.mxu0 0.0
    %430 = vmatpush1.msra.mxu0 0.0
    %431 = vmatprep.subr.mxu0 0.0
    %432 = vmatpush1.msra.mxu0 0.0
    %433 = vmatprep.subr.mxu0 0.0
    %434 = vmatpush1.msra.mxu0 0.0
    %435 = vmatprep.subr.mxu0 0.0
    %436 = vmatpush1.msra.mxu0 0.0
    %437 = vmatprep.subr.mxu0 0.0
    %438 = vmatpush1.msra.mxu0 0.0
    %439 = vmatprep.subr.mxu0 0.0
    %440 = vmatpush1.msra.mxu0 0.0
    %441 = vmatprep.subr.mxu0 0.0
    %442 = vmatpush1.msra.mxu0 0.0
    %443 = vmatprep.subr.mxu0 0.0
    %444 = vmatpush1.msra.mxu0 0.0
    %445 = vmatprep.subr.mxu0 0.0
    %446 = vmatpush1.msra.mxu0 0.0
    %447 = vmatprep.subr.mxu0 0.0
    %448 = vmatpush1.msra.mxu0 0.0
    %449 = vmatprep.subr.mxu0 0.0
    %450 = vmatpush1.msra.mxu0 0.0
    %451 = vmatprep.subr.mxu0 0.0
    %452 = vmatpush1.msra.mxu0 0.0
    %453 = vmatprep.subr.mxu0 0.0
    %454 = vmatpush1.msra.mxu0 0.0
    %455 = vmatprep.subr.mxu0 0.0
    %456 = vmatpush1.msra.mxu0 0.0
    %457 = vmatprep.subr.mxu0 0.0
    %458 = vmatpush1.msra.mxu0 0.0
    %459 = vmatprep.subr.mxu0 0.0
    %460 = vmatpush1.msra.mxu0 0.0
    %461 = vmatprep.subr.mxu0 0.0
    %462 = vmatpush1.msra.mxu0 0.0
    %463 = vmatprep.subr.mxu0 0.0
    %464 = vmatpush1.msra.mxu0 0.0
    %465 = vmatprep.subr.mxu0 0.0
    %466 = vmatpush1.msra.mxu0 0.0
    %467 = vmatprep.subr.mxu0 0.0
    %468 = vmatpush1.msra.mxu0 0.0
    %469 = vmatprep.subr.mxu0 0.0
    %470 = vmatpush1.msra.mxu0 0.0
    %471 = vmatprep.subr.mxu0 0.0
    %472 = vmatpush1.msra.mxu0 0.0
    %473 = vmatprep.subr.mxu0 0.0
    %474 = vmatpush1.msra.mxu0 0.0
    %475 = vmatprep.subr.mxu0 0.0
    %476 = vmatpush1.msra.mxu0 0.0
    %477 = vmatprep.mubr.f32.mxu0 0.0
    %478 = vmatmul.mubr.f32.gmra.mrb[0].mxu0 %v408
    %v479 = vpop.f32.mrb[0].mxu0
    %v480 = vadd.f32 0.0, %v479
    %v481 = vpop.f32.mrb[0].mxu0
    %482 = vmatprep.mubr.f32.mxu0 0.0
    %483 = vmatmul.mubr.f32.gmra.mrb[0].mxu0 %v411
    %v484 = vpop.f32.mrb[0].mxu0
    %v485 = vadd.f32 0.0, %v484
    %v486 = vpop.f32.mrb[0].mxu0
    %487 = vdwg.mxu0
    %v489 = vsel %vm105, %v480, 0
    %v492 = vsel %vm105, %v485, 0
    %v495 = vsel %vm105, %v17, 0
    %v498 = vsel %vm105, %v18, 0
    %v501 = vsel %vm105, %v19, 0
    %v504 = vsel %vm105, %v20, 0
    %506 = vmatprep.subr.mxu0 0.0
    %507 = vmatpush1.xpose.msra.mxu0 %v495
    %508 = vmatprep.subr.mxu0 0.0
    %509 = vmatpush1.xpose.msra.mxu0 %v498
    %510 = vmatprep.subr.mxu0 0.0
    %511 = vmatpush1.xpose.msra.mxu0 %v501
    %512 = vmatprep.subr.mxu0 0.0
    %513 = vmatpush1.xpose.msra.mxu0 %v504
    %514 = vmatprep.subr.mxu0 0.0
    %515 = vmatpush1.xpose.msra.mxu0 0.0
    %516 = vmatprep.subr.mxu0 0.0
    %517 = vmatpush1.xpose.msra.mxu0 0.0
    %518 = vmatprep.subr.mxu0 0.0
    %519 = vmatpush1.xpose.msra.mxu0 0.0
    %520 = vmatprep.subr.mxu0 0.0
    %521 = vmatpush1.xpose.msra.mxu0 0.0
    %522 = vmatprep.subr.mxu0 0.0
    %523 = vmatpush1.xpose.msra.mxu0 0.0
    %524 = vmatprep.subr.mxu0 0.0
    %525 = vmatpush1.xpose.msra.mxu0 0.0
    %526 = vmatprep.subr.mxu0 0.0
    %527 = vmatpush1.xpose.msra.mxu0 0.0
    %528 = vmatprep.subr.mxu0 0.0
    %529 = vmatpush1.xpose.msra.mxu0 0.0
    %530 = vmatprep.subr.mxu0 0.0
    %531 = vmatpush1.xpose.msra.mxu0 0.0
    %532 = vmatprep.subr.mxu0 0.0
    %533 = vmatpush1.xpose.msra.mxu0 0.0
    %534 = vmatprep.subr.mxu0 0.0
    %535 = vmatpush1.xpose.msra.mxu0 0.0
    %536 = vmatprep.subr.mxu0 0.0
    %537 = vmatpush1.xpose.msra.mxu0 0.0
    %538 = vmatprep.subr.mxu0 0.0
    %539 = vmatpush1.xpose.msra.mxu0 0.0
    %540 = vmatprep.subr.mxu0 0.0
    %541 = vmatpush1.xpose.msra.mxu0 0.0
    %542 = vmatprep.subr.mxu0 0.0
    %543 = vmatpush1.xpose.msra.mxu0 0.0
    %544 = vmatprep.subr.mxu0 0.0
    %545 = vmatpush1.xpose.msra.mxu0 0.0
    %546 = vmatprep.subr.mxu0 0.0
    %547 = vmatpush1.xpose.msra.mxu0 0.0
    %548 = vmatprep.subr.mxu0 0.0
    %549 = vmatpush1.xpose.msra.mxu0 0.0
    %550 = vmatprep.subr.mxu0 0.0
    %551 = vmatpush1.xpose.msra.mxu0 0.0
    %552 = vmatprep.subr.mxu0 0.0
    %553 = vmatpush1.xpose.msra.mxu0 0.0
    %554 = vmatprep.subr.mxu0 0.0
    %555 = vmatpush1.xpose.msra.mxu0 0.0
    %556 = vmatprep.subr.mxu0 0.0
    %557 = vmatpush1.xpose.msra.mxu0 0.0
    %558 = vmatprep.subr.mxu0 0.0
    %559 = vmatpush1.xpose.msra.mxu0 0.0
    %560 = vmatprep.subr.mxu0 0.0
    %561 = vmatpush1.xpose.msra.mxu0 0.0
    %562 = vmatprep.subr.mxu0 0.0
    %563 = vmatpush1.xpose.msra.mxu0 0.0
    %564 = vmatprep.subr.mxu0 0.0
    %565 = vmatpush1.xpose.msra.mxu0 0.0
    %566 = vmatprep.subr.mxu0 0.0
    %567 = vmatpush1.xpose.msra.mxu0 0.0
    %568 = vmatprep.subr.mxu0 0.0
    %569 = vmatpush1.xpose.msra.mxu0 0.0
    %570 = vmatprep.mubr.f32.mxu0 0.0
    %571 = vmatmul.mubr.f32.gmra.mrb[0].mxu0 %v489
    %v572 = vpop.f32.mrb[0].mxu0
    %v573 = vadd.f32 0.0, %v572
    %v574 = vpop.f32.mrb[0].mxu0
    %575 = vmatprep.mubr.f32.mxu0 0.0
    %576 = vmatmul.mubr.f32.gmra.mrb[0].mxu0 %v492
    %v577 = vpop.f32.mrb[0].mxu0
    %v578 = vadd.f32 0.0, %v577
    %v579 = vpop.f32.mrb[0].mxu0
    %580 = vdwg.mxu0
    %v581 = vsub.f32 %v405, %v573
    %v582 = vsub.f32 %v406, %v578
    %v583 = vmul.f32 %v581, %v581
    %v584 = vmul.f32 %v582, %v582
    %v585 = vsel %vm23, %v583, 0.0
    %586 = vadd.xlane.f32.xlu0 %v585
    %v587 = vpop.xlane.xlu0 %586
    %v588 = vsel %vm23, %v584, 0.0
    %589 = vadd.xlane.f32.xlu0 %v588
    %v590 = vpop.xlane.xlu0 %589
    %v591 = vrsqrt.pop %v587
    %v592 = vmul.f32 %v587, %v591
    %vm593 = vcmp.eq.f32.partialorder %v587, inf
    %v594 = vsel %vm593, %v587, %v592
    %vm595 = vcmp.eq.f32.partialorder %v587, 0.0
    %v596 = vand.u32 %v587, 2147483648
    %v597 = vsel %vm595, %v596, %v594
    %v598 = vrsqrt.pop %v590
    %v599 = vmul.f32 %v590, %v598
    %vm600 = vcmp.eq.f32.partialorder %v590, inf
    %v601 = vsel %vm600, %v590, %v599
    %vm602 = vcmp.eq.f32.partialorder %v590, 0.0
    %v603 = vand.u32 %v590, 2147483648
    %v604 = vsel %vm602, %v603, %v601
    %v607 = vlaneseq
    %v608 = vand.u32 %v607, 127
    %v609 = vlaneseq
    %v610 = vshrl.u32 %v609, 7
    %v611 = vsub.s32 %v608, %v610
    %v612 = vrot.slane %v597, %v611
    %v613 = vlaneseq
    %v614 = vshrl.u32 %v613, 7
    %v615 = vsub.s32 %v608, %v614
    %v616 = vrot.slane %v604, %v615
    %vm617 = vcmask 1041409
    %v618 = vsel %vm617, %v616, %v612
    %vm620 = vcmask 58368
    %v621 = vsel %vm620, %v618, 0.0
    %622 = vadd.xlane.f32.xlu0 %v621
    %v623 = vpop.xlane.xlu0 %622
    %vm624 = vcmask 1024
    %625 = vst.msk [vmem:[%s4] sm:$0x3] %vm624, %v623
    // Predicated region
    $region14: #{tpu_custom_call.1} parent=1 // pred_check
      _
    $region15: #{tpu_custom_call.1} parent=1 // pred_check_branch
      %627 = sbr.rel (0) target = $region17
    $region16: #{tpu_custom_call.1} parent=1 // pred_region
      %s629 = ssub.s32 32, 32
      %630 = vsyncadd [#allocation3], %s629
      %s632 = sshll.u32 [#allocation2], 4
      %s633 = int_to_ptr.vmem [resolvable:$true] %s632
      %635 = dma.vmem_to_hbm [thread:$0]  %s633, 32, %s3, [#allocation3]
    $region17: #{tpu_custom_call.1} parent=1 // pred_fallthru
      _
    // Predicated region
    $region18: #{tpu_custom_call.1} parent=1 // pred_check
      _
    $region19: #{tpu_custom_call.1} parent=1 // pred_check_branch
      %637 = sbr.rel (0) target = $region21
    $region20: #{tpu_custom_call.1} parent=1 // pred_region
      _
    $region21: #{tpu_custom_call.1} parent=1 // pred_fallthru
      _
    // Predicated region
    $region22: #{tpu_custom_call.1} parent=1 // pred_check
      _
    $region23: #{tpu_custom_call.1} parent=1 // pred_check_branch
      %639 = sbr.rel (0) target = $region25
    $region24: #{tpu_custom_call.1} parent=1 // pred_region
      %640 = dma.done [#allocation3], 32
    $region25: #{tpu_custom_call.1} parent=1 // pred_fallthru
      _
    // Predicated region
    $region26: #{tpu_custom_call.1} parent=1 // pred_check
      _
    $region27: #{tpu_custom_call.1} parent=1 // pred_check_branch
      %642 = sbr.rel (0) target = $region29
    $region28: #{tpu_custom_call.1} parent=1 // pred_region
      _
    $region29: #{tpu_custom_call.1} parent=1 // pred_fallthru
      _
    %643 = vsyncpa [#allocation3], 1

</llo_original>
